<compile_context>
chip_gen: v7x
topology: tpu7x:2x2x1
jax: 0.10.0
libtpu: 0.0.40
codegen_flags: <defaults>
</compile_context>

<pallas_src>
import math

import jax
import jax.numpy as jnp
from jax.experimental import pallas as pl
from jax.experimental.pallas import tpu as pltpu

TWO_PI = 2.0 * math.pi
EPS = 1e-6  # kornia rgb_to_hsv default eps


def _adjust_hue_kernel(hue_ref, x_ref, o_ref):
    b = pl.program_id(0)
    hue_n = hue_ref[b]  # hue_factor / (2*pi), float32, from SMEM

    r = x_ref[0, 0].astype(jnp.float32)
    g = x_ref[0, 1].astype(jnp.float32)
    bl = x_ref[0, 2].astype(jnp.float32)

    # ---- rgb_to_hsv (kornia) ----
    maxc = jnp.maximum(jnp.maximum(r, g), bl)
    minc = jnp.minimum(jnp.minimum(r, g), bl)
    v = maxc
    deltac = maxc - minc
    s = deltac / (v + EPS)
    dsafe = jnp.where(deltac == 0.0, jnp.float32(1.0), deltac)

    rc = maxc - r
    gc = maxc - g
    bc = maxc - bl

    # first-occurrence argmax over channels (R, then G, then B)
    h_sel = jnp.where(
        r == maxc, bc - gc,
        jnp.where(g == maxc, 2.0 * dsafe + rc - bc, 4.0 * dsafe + gc - rc))

    # normalized hue in [0,1):  ((h_sel/dsafe)/6) mod 1
    hn = h_sel / (6.0 * dsafe)
    hn = hn - jnp.floor(hn)

    # ---- hue shift (normalized).  Hue is circular and the hsv->rgb path below
    # is mod-6 invariant, so floor-mod here reproduces torch.fmod(h+hue, 2*pi).
    hn = hn + hue_n
    hn = hn - jnp.floor(hn)

    # ---- hsv_to_rgb, branch-free form ----
    h6 = hn * 6.0           # [0, 6)
    vs = v * s
    one = jnp.float32(1.0)
    zero = jnp.float32(0.0)

    def chan(n):
        k = h6 + n          # [n, n+6)
        k = jnp.where(k >= 6.0, k - 6.0, k)       # (n + h6) mod 6
        w = jnp.clip(jnp.minimum(k, 4.0 - k), zero, one)
        return v - vs * w

    o_ref[0, 0] = chan(jnp.float32(5.0)).astype(o_ref.dtype)
    o_ref[0, 1] = chan(jnp.float32(3.0)).astype(o_ref.dtype)
    o_ref[0, 2] = chan(jnp.float32(1.0)).astype(o_ref.dtype)


def _tile_params(n_pixels):
    """Pick a lane-dense, (8,128)-aligned spatial tile, capped at ~1.5 MiB."""
    lanes = 512 if n_pixels >= 4096 else 128
    rows_needed = pl.cdiv(n_pixels, lanes)
    if rows_needed >= 256:
        rows = 256                                   # 3*256*512*4B = 1.5 MiB block
    else:
        rows = ((rows_needed + 7) // 8) * 8          # small images: one tiny tile
    rows_padded = pl.cdiv(rows_needed, rows) * rows
    return lanes, rows, rows_padded


def adjust_hue_pallas(x, hue_factor):
    """x: (B, 3, H, W) RGB in [0,1].  hue_factor: float or (B,) array in [-pi, pi]."""
    B, C, H, W = x.shape
    assert C == 3, "AdjustHue expects 3 channels (RGB)"
    P = H * W

    lanes, rows, rows_padded = _tile_params(P)
    P_pad = rows_padded * lanes

    xf = x.reshape(B, 3, P)
    if P_pad != P:
        xf = jnp.pad(xf, ((0, 0), (0, 0), (0, P_pad - P)))
    xt = xf.reshape(B, 3, rows_padded, lanes)

    # Per-batch hue factor, pre-normalized to "turns" (hue / 2pi), kept float32.
    hue = jnp.asarray(hue_factor, dtype=jnp.float32)
    if hue.ndim > 0:
        hue = jnp.broadcast_to(hue.reshape(-1), (B,))
    else:
        hue = jnp.broadcast_to(hue, (B,))
    hue_n = (hue / TWO_PI).astype(jnp.float32)

    n_tiles = rows_padded // rows
    out = pl.pallas_call(
        _adjust_hue_kernel,
        out_shape=jax.ShapeDtypeStruct((B, 3, rows_padded, lanes), x.dtype),
        grid=(B, n_tiles),
        in_specs=[
            pl.BlockSpec(memory_space=pltpu.MemorySpace.SMEM),            # per-batch hue
            pl.BlockSpec((1, 3, rows, lanes), lambda b, t: (b, 0, t, 0)),  # spatial tile
        ],
        out_specs=pl.BlockSpec((1, 3, rows, lanes), lambda b, t: (b, 0, t, 0)),
        compiler_params=pltpu.CompilerParams(
            dimension_semantics=("parallel", "parallel")),
    )(hue_n, xt)

    return out.reshape(B, 3, P_pad)[:, :, :P].reshape(B, 3, H, W)


# ---- pure-JAX reference (kornia math, table-based hsv->rgb) ----
def _ref_adjust_hue(x, hue_factor):
    xf = x.astype(jnp.float32)
    r, g, b = xf[:, 0], xf[:, 1], xf[:, 2]
    maxc = jnp.maximum(jnp.maximum(r, g), b)
    minc = jnp.minimum(jnp.minimum(r, g), b)
    v = maxc
    deltac = maxc - minc
    s = deltac / (v + EPS)
    dsafe = jnp.where(deltac == 0, 1.0, deltac)
    rc, gc, bc = maxc - r, maxc - g, maxc - b
    h_sel = jnp.where(r == maxc, bc - gc,
                      jnp.where(g == maxc, 2.0 * dsafe + rc - bc, 4.0 * dsafe + gc - rc))
    h = TWO_PI * (((h_sel / dsafe) / 6.0) % 1.0)
    hue = jnp.asarray(hue_factor, jnp.float32)
    hue = hue.reshape(-1, 1, 1) if hue.ndim > 0 else hue
    h = jnp.fmod(h + hue, TWO_PI)
    h6 = (h / TWO_PI) * 6.0
    hi = jnp.floor(h6) % 6.0
    f = (h6 % 6.0) - hi
    hi = hi.astype(jnp.int32)
    p = v * (1.0 - s)
    q = v * (1.0 - f * s)
    t = v * (1.0 - (1.0 - f) * s)
    r_tab = jnp.stack([v, q, p, p, t, v])
    g_tab = jnp.stack([t, v, v, q, p, p])
    b_tab = jnp.stack([p, p, t, v, v, q])
    pick = lambda tab: jnp.take_along_axis(tab, hi[None], axis=0)[0]
    return jnp.stack([pick(r_tab), pick(g_tab), pick(b_tab)], axis=1).astype(x.dtype)


if __name__ == "__main__":
    key = jax.random.PRNGKey(0)
    B, C, H, W = 2, 3, 16, 16
    x = jax.random.uniform(key, (B, C, H, W), dtype=jnp.float32)

    # scalar hue factor (module parameter)
    hue_factor = 0.7
    y = adjust_hue_pallas(x, hue_factor)
    jax.block_until_ready(y)
    y_ref = _ref_adjust_hue(x, hue_factor)
    assert y.shape == x.shape and y.dtype == x.dtype
    assert jnp.allclose(y, y_ref, atol=1e-5, rtol=1e-5), "mismatch vs reference (scalar hue)"

    # per-batch hue factors
    hue_vec = jnp.array([-1.3, 2.1], dtype=jnp.float32)
    y2 = adjust_hue_pallas(x, hue_vec)
    jax.block_until_ready(y2)
    y2_ref = _ref_adjust_hue(x, hue_vec)
    assert jnp.allclose(y2, y2_ref, atol=1e-5, rtol=1e-5), "mismatch vs reference (vector hue)"

    print("KERNEL_OK")
</pallas_src>

<mosaic_0001>
module attributes {stable_mosaic.version = 11 : i64} {
  func.func @_adjust_hue_kernel(%arg0: i32, %arg1: i32, %arg2: memref<2xf32, #tpu.memory_space<smem>>, %arg3: memref<1x3x8x128xf32, #tpu.memory_space<vmem>>, %arg4: memref<1x3x8x128xf32, #tpu.memory_space<vmem>>) attributes {dimension_semantics = [#tpu.dimension_semantics<parallel>, #tpu.dimension_semantics<parallel>], iteration_bounds = array<i64: 2, 1>, scalar_prefetch = 0 : i64, scratch_operands = 0 : i64, tpu.core_type = #tpu.core_type<tc>, window_params = [{transform_indices = @transform_0, window_bounds = array<i64: 2>}, {transform_indices = @transform_1, window_bounds = array<i64: 1, 3, 8, 128>}, {transform_indices = @transform_2, window_bounds = array<i64: 1, 3, 8, 128>}]} {
    %0 = arith.index_cast %arg0 : i32 to index
    %1 = memref.load %arg2[%0] : memref<2xf32, #tpu.memory_space<smem>>
    %c0 = arith.constant 0 : index
    %c0_0 = arith.constant 0 : index
    %c0_1 = arith.constant 0 : index
    %c0_2 = arith.constant 0 : index
    %2 = vector.load %arg3[%c0, %c0_0, %c0_1, %c0_2] : memref<1x3x8x128xf32, #tpu.memory_space<vmem>>, vector<1x1x8x128xf32>
    %3 = vector.shape_cast %2 : vector<1x1x8x128xf32> to vector<8x128xf32>
    %c0_3 = arith.constant 0 : index
    %c1 = arith.constant 1 : index
    %c0_4 = arith.constant 0 : index
    %c0_5 = arith.constant 0 : index
    %4 = vector.load %arg3[%c0_3, %c1, %c0_4, %c0_5] : memref<1x3x8x128xf32, #tpu.memory_space<vmem>>, vector<1x1x8x128xf32>
    %5 = vector.shape_cast %4 : vector<1x1x8x128xf32> to vector<8x128xf32>
    %c0_6 = arith.constant 0 : index
    %c2 = arith.constant 2 : index
    %c0_7 = arith.constant 0 : index
    %c0_8 = arith.constant 0 : index
    %6 = vector.load %arg3[%c0_6, %c2, %c0_7, %c0_8] : memref<1x3x8x128xf32, #tpu.memory_space<vmem>>, vector<1x1x8x128xf32>
    %7 = vector.shape_cast %6 : vector<1x1x8x128xf32> to vector<8x128xf32>
    %8 = arith.maximumf %3, %5 : vector<8x128xf32>
    %9 = arith.maximumf %8, %7 : vector<8x128xf32>
    %10 = arith.minimumf %3, %5 : vector<8x128xf32>
    %11 = arith.minimumf %10, %7 : vector<8x128xf32>
    %12 = arith.subf %9, %11 : vector<8x128xf32>
    %cst = arith.constant 9.99999997E-7 : f32
    %13 = vector.broadcast %cst : f32 to vector<8x128xf32>
    %14 = arith.addf %9, %13 : vector<8x128xf32>
    %15 = arith.divf %12, %14 : vector<8x128xf32>
    %cst_9 = arith.constant 0.000000e+00 : f32
    %16 = vector.broadcast %cst_9 : f32 to vector<8x128xf32>
    %17 = arith.cmpf oeq, %12, %16 : vector<8x128xf32>
    %cst_10 = arith.constant 1.000000e+00 : f32
    %18 = vector.broadcast %cst_10 : f32 to vector<8x128xf32>
    %19 = arith.select %17, %18, %12 : vector<8x128xi1>, vector<8x128xf32>
    %20 = arith.subf %9, %3 : vector<8x128xf32>
    %21 = arith.subf %9, %5 : vector<8x128xf32>
    %22 = arith.subf %9, %7 : vector<8x128xf32>
    %23 = arith.cmpf oeq, %3, %9 : vector<8x128xf32>
    %24 = arith.subf %22, %21 : vector<8x128xf32>
    %25 = arith.cmpf oeq, %5, %9 : vector<8x128xf32>
    %cst_11 = arith.constant 2.000000e+00 : f32
    %26 = vector.broadcast %cst_11 : f32 to vector<8x128xf32>
    %27 = arith.mulf %26, %19 : vector<8x128xf32>
    %28 = arith.addf %27, %20 : vector<8x128xf32>
    %29 = arith.subf %28, %22 : vector<8x128xf32>
    %cst_12 = arith.constant 4.000000e+00 : f32
    %30 = vector.broadcast %cst_12 : f32 to vector<8x128xf32>
    %31 = arith.mulf %30, %19 : vector<8x128xf32>
    %32 = arith.addf %31, %21 : vector<8x128xf32>
    %33 = arith.subf %32, %20 : vector<8x128xf32>
    %34 = arith.select %25, %29, %33 : vector<8x128xi1>, vector<8x128xf32>
    %35 = arith.select %23, %24, %34 : vector<8x128xi1>, vector<8x128xf32>
    %cst_13 = arith.constant 6.000000e+00 : f32
    %36 = vector.broadcast %cst_13 : f32 to vector<8x128xf32>
    %37 = arith.mulf %36, %19 : vector<8x128xf32>
    %38 = arith.divf %35, %37 : vector<8x128xf32>
    %39 = math.floor %38 : vector<8x128xf32>
    %40 = arith.subf %38, %39 : vector<8x128xf32>
    %41 = vector.broadcast %1 : f32 to vector<8x128xf32>
    %42 = arith.addf %40, %41 : vector<8x128xf32>
    %43 = math.floor %42 : vector<8x128xf32>
    %44 = arith.subf %42, %43 : vector<8x128xf32>
    %cst_14 = arith.constant 6.000000e+00 : f32
    %45 = vector.broadcast %cst_14 : f32 to vector<8x128xf32>
    %46 = arith.mulf %44, %45 : vector<8x128xf32>
    %47 = arith.mulf %9, %15 : vector<8x128xf32>
    %cst_15 = arith.constant 5.000000e+00 : f32
    %48 = vector.broadcast %cst_15 : f32 to vector<8x128xf32>
    %49 = arith.addf %46, %48 : vector<8x128xf32>
    %cst_16 = arith.constant 6.000000e+00 : f32
    %50 = vector.broadcast %cst_16 : f32 to vector<8x128xf32>
    %51 = arith.cmpf oge, %49, %50 : vector<8x128xf32>
    %cst_17 = arith.constant 6.000000e+00 : f32
    %52 = vector.broadcast %cst_17 : f32 to vector<8x128xf32>
    %53 = arith.subf %49, %52 : vector<8x128xf32>
    %54 = arith.select %51, %53, %49 : vector<8x128xi1>, vector<8x128xf32>
    %cst_18 = arith.constant 4.000000e+00 : f32
    %55 = vector.broadcast %cst_18 : f32 to vector<8x128xf32>
    %56 = arith.subf %55, %54 : vector<8x128xf32>
    %57 = arith.minimumf %54, %56 : vector<8x128xf32>
    %cst_19 = arith.constant 0.000000e+00 : f32
    %cst_20 = arith.constant 1.000000e+00 : f32
    %58 = vector.broadcast %cst_19 : f32 to vector<8x128xf32>
    %59 = arith.maximumf %58, %57 : vector<8x128xf32>
    %60 = vector.broadcast %cst_20 : f32 to vector<8x128xf32>
    %61 = arith.minimumf %60, %59 : vector<8x128xf32>
    %62 = arith.mulf %47, %61 : vector<8x128xf32>
    %63 = arith.subf %9, %62 : vector<8x128xf32>
    %c0_21 = arith.constant 0 : index
    %c0_22 = arith.constant 0 : index
    %c0_23 = arith.constant 0 : index
    %c0_24 = arith.constant 0 : index
    %64 = vector.load %arg4[%c0_21, %c0_22, %c0_23, %c0_24] : memref<1x3x8x128xf32, #tpu.memory_space<vmem>>, vector<1x1x8x128xf32>
    %65 = vector.shape_cast %64 : vector<1x1x8x128xf32> to vector<8x128xf32>
    %66 = vector.shape_cast %63 : vector<8x128xf32> to vector<1x1x8x128xf32>
    tpu.vector_store %arg4[%c0_21, %c0_22, %c0_23, %c0_24], %66 {strides = array<i32>} : memref<1x3x8x128xf32, #tpu.memory_space<vmem>>, vector<1x1x8x128xf32>,
    %cst_25 = arith.constant 3.000000e+00 : f32
    %67 = vector.broadcast %cst_25 : f32 to vector<8x128xf32>
    %68 = arith.addf %46, %67 : vector<8x128xf32>
    %cst_26 = arith.constant 6.000000e+00 : f32
    %69 = vector.broadcast %cst_26 : f32 to vector<8x128xf32>
    %70 = arith.cmpf oge, %68, %69 : vector<8x128xf32>
    %cst_27 = arith.constant 6.000000e+00 : f32
    %71 = vector.broadcast %cst_27 : f32 to vector<8x128xf32>
    %72 = arith.subf %68, %71 : vector<8x128xf32>
    %73 = arith.select %70, %72, %68 : vector<8x128xi1>, vector<8x128xf32>
    %cst_28 = arith.constant 4.000000e+00 : f32
    %74 = vector.broadcast %cst_28 : f32 to vector<8x128xf32>
    %75 = arith.subf %74, %73 : vector<8x128xf32>
    %76 = arith.minimumf %73, %75 : vector<8x128xf32>
    %cst_29 = arith.constant 0.000000e+00 : f32
    %cst_30 = arith.constant 1.000000e+00 : f32
    %77 = vector.broadcast %cst_29 : f32 to vector<8x128xf32>
    %78 = arith.maximumf %77, %76 : vector<8x128xf32>
    %79 = vector.broadcast %cst_30 : f32 to vector<8x128xf32>
    %80 = arith.minimumf %79, %78 : vector<8x128xf32>
    %81 = arith.mulf %47, %80 : vector<8x128xf32>
    %82 = arith.subf %9, %81 : vector<8x128xf32>
    %c0_31 = arith.constant 0 : index
    %c1_32 = arith.constant 1 : index
    %c0_33 = arith.constant 0 : index
    %c0_34 = arith.constant 0 : index
    %83 = vector.load %arg4[%c0_31, %c1_32, %c0_33, %c0_34] : memref<1x3x8x128xf32, #tpu.memory_space<vmem>>, vector<1x1x8x128xf32>
    %84 = vector.shape_cast %83 : vector<1x1x8x128xf32> to vector<8x128xf32>
    %85 = vector.shape_cast %82 : vector<8x128xf32> to vector<1x1x8x128xf32>
    tpu.vector_store %arg4[%c0_31, %c1_32, %c0_33, %c0_34], %85 {strides = array<i32>} : memref<1x3x8x128xf32, #tpu.memory_space<vmem>>, vector<1x1x8x128xf32>,
    %cst_35 = arith.constant 1.000000e+00 : f32
    %86 = vector.broadcast %cst_35 : f32 to vector<8x128xf32>
    %87 = arith.addf %46, %86 : vector<8x128xf32>
    %cst_36 = arith.constant 6.000000e+00 : f32
    %88 = vector.broadcast %cst_36 : f32 to vector<8x128xf32>
    %89 = arith.cmpf oge, %87, %88 : vector<8x128xf32>
    %cst_37 = arith.constant 6.000000e+00 : f32
    %90 = vector.broadcast %cst_37 : f32 to vector<8x128xf32>
    %91 = arith.subf %87, %90 : vector<8x128xf32>
    %92 = arith.select %89, %91, %87 : vector<8x128xi1>, vector<8x128xf32>
    %cst_38 = arith.constant 4.000000e+00 : f32
    %93 = vector.broadcast %cst_38 : f32 to vector<8x128xf32>
    %94 = arith.subf %93, %92 : vector<8x128xf32>
    %95 = arith.minimumf %92, %94 : vector<8x128xf32>
    %cst_39 = arith.constant 0.000000e+00 : f32
    %cst_40 = arith.constant 1.000000e+00 : f32
    %96 = vector.broadcast %cst_39 : f32 to vector<8x128xf32>
    %97 = arith.maximumf %96, %95 : vector<8x128xf32>
    %98 = vector.broadcast %cst_40 : f32 to vector<8x128xf32>
    %99 = arith.minimumf %98, %97 : vector<8x128xf32>
    %100 = arith.mulf %47, %99 : vector<8x128xf32>
    %101 = arith.subf %9, %100 : vector<8x128xf32>
    %c0_41 = arith.constant 0 : index
    %c2_42 = arith.constant 2 : index
    %c0_43 = arith.constant 0 : index
    %c0_44 = arith.constant 0 : index
    %102 = vector.load %arg4[%c0_41, %c2_42, %c0_43, %c0_44] : memref<1x3x8x128xf32, #tpu.memory_space<vmem>>, vector<1x1x8x128xf32>
    %103 = vector.shape_cast %102 : vector<1x1x8x128xf32> to vector<8x128xf32>
    %104 = vector.shape_cast %101 : vector<8x128xf32> to vector<1x1x8x128xf32>
    tpu.vector_store %arg4[%c0_41, %c2_42, %c0_43, %c0_44], %104 {strides = array<i32>} : memref<1x3x8x128xf32, #tpu.memory_space<vmem>>, vector<1x1x8x128xf32>,
    return
  }
  func.func @transform_0(%arg0: i32, %arg1: i32) -> i32 {
    %c0_i32 = arith.constant 0 : i32
    %c0_i32_0 = arith.constant 0 : i32
    return %c0_i32 : i32
  }
  func.func @transform_1(%arg0: i32, %arg1: i32) -> (i32, i32, i32, i32) {
    %c0_i32 = arith.constant 0 : i32
    %c0_i32_0 = arith.constant 0 : i32
    %c0_i32_1 = arith.constant 0 : i32
    return %arg0, %c0_i32, %arg1, %c0_i32_0 : i32, i32, i32, i32
  }
  func.func @transform_2(%arg0: i32, %arg1: i32) -> (i32, i32, i32, i32) {
    %c0_i32 = arith.constant 0 : i32
    %c0_i32_0 = arith.constant 0 : i32
    %c0_i32_1 = arith.constant 0 : i32
    return %arg0, %c0_i32, %arg1, %c0_i32_0 : i32, i32, i32, i32
  }
}

</mosaic_0001>

<llo_original>
// kernel: tpu_custom_call.1
$region0: #{tpu_custom_call.1}
  #allocation0 [shape = 'u32[]', space=smem, size = 0x4, offset = 0x4, fixed_abs, tag = 'smem constant byte address 0x4 - core index']
  #allocation1 [shape = 'u32[144,128]{1,0:T(1,128)}', space=vmem, size = 0x12000, scoped, tag = 'internal scratch']
  %s0 = inlined_call_operand.hbm [shape: f32[2], index: 0, kind: input, shape index: {}]
  %s1 = inlined_call_operand.hbm [shape: f32[2,3,8,128], index: 1, kind: input, shape index: {}]
  %s2 = inlined_call_operand.hbm [shape: f32[2,3,8,128], index: 2, kind: output, shape index: {}]
  %s3 = sld [smem:[#allocation0]]
  $region49: #{tpu_custom_call.1} parent=0
    _
  %s5 = ssub.s32 1, %s3
  %s6 = scalar_select 0, %s5, %s3
  $region1: #{tpu_custom_call.1} parent=0
    #allocation2 [shape = 'u8[512]{0}', space=smem, size = 0x200, scoped, tag = 'input window, operand 0, single buffered']
    #allocation3 [shape = 's32[2]{0}', space=sflag, size = 0x8, scoped, tag = 'scoped memory for tpu_custom_call.1']
    #allocation4 [shape = 's32[2]{0}', space=sflag, size = 0x8, scoped, tag = 'scoped memory for tpu_custom_call.1']
    #allocation5 [shape = 's32[2]{0}', space=sflag, size = 0x8, scoped, tag = 'scoped memory for tpu_custom_call.1']
    #allocation6 [shape = 'u8[24576]{0}', space=vmem, size = 0x6000, scoped, tag = 'input window, operand 1']
    #allocation7 [shape = 'u8[24576]{0}', space=vmem, size = 0x6000, scoped, tag = 'output window, operand 0']
    %7 = vsyncpa [#allocation5], 0
    %8 = vsyncpa [#allocation3], 0
    %s9 = scalar_lea.sflag [#allocation3], 1
    %10 = vsyncpa %s9, 0
    %11 = vsyncpa [#allocation4], 0
    %s12 = scalar_lea.sflag [#allocation4], 1
    %13 = vsyncpa %s12, 0
    loop: start=0, step=1, limit=4
    $region2: #{tpu_custom_call.1} parent=1 // loop_pre_header
      _
    $region3: #{tpu_custom_call.1} parent=1 // loop_header
      %s15 = sphi 0, %s19
      %p16 = scmp.ge.s32.totalorder %s15, 4
      %s22 = sphi 0, %s34
      %s23 = sphi 0, %s30
      %s24 = sphi 0, %s22
      %s25 = sphi 0, %s23
      %s26 = sphi 0, %s24
      %s27 = sphi 0, %s25
      %s35 = sphi 0, %s35
      %s37 = sphi 0, %s35
      %s38 = sphi 0, %s37
      %s52 = sphi 0, %s38
      %s60 = sphi 0, %s62
      %s63 = sphi 0, %s60
      %s64 = sphi 0, %s63
      %s80 = sphi 0, %s64
      %s88 = sphi 0, %s90
      %s91 = sphi 0, %s88
      %s92 = sphi 0, %s91
      %s108 = sphi 0, %s92
    $region4: #{tpu_custom_call.1} parent=1 // loop_header_branch
      %18 = sbr.rel (%p16) target = $region8
    $region5: #{tpu_custom_call.1} parent=1 // loop_body
      %s20 = ssub.s32 %s15, 1
      %s21 = ssub.s32 %s15, 2
      %s28 = sadd.s32 1, %s23
      %p29 = scmp.ge.s32.totalorder %s28, 1
      %s30 = scalar_select %p29, 0, %s28
      %s31 = sadd.s32 1, %s22
      %s32 = scalar_select %p29, %s31, %s22
      %p33 = scmp.ge.s32.totalorder %s32, 2
      %s34 = scalar_select %p33, 0, %s32
      %s36 = sadd.s32 %s35, 1
      %p39 = scmp.eq.s32.totalorder %s15, 1
      %p40 = scmp.ne.s32.totalorder %s35, %s37
      %p41 = scmp.eq.s32.totalorder %s15, 0
      %p42 = por %p40, %p41
      %p43 = scmp.ne.s32.totalorder %s35, %s37
      %p44 = scmp.eq.s32.totalorder %s20, 1
      %p45 = por %p43, %p44
      %p46 = scmp.ne.s32.totalorder %s37, %s38
      %p47 = scmp.eq.s32.totalorder %s20, 0
      %p48 = por %p46, %p47
      %p49 = scmp.ne.s32.totalorder %s37, %s38
      %p50 = scmp.eq.s32.totalorder %s21, 1
      %p51 = por %p49, %p50
      %p53 = scmp.ne.s32.totalorder %s38, %s52
      %p54 = scmp.eq.s32.totalorder %s21, 0
      %p55 = por %p53, %p54
      %s56 = ssub.s32 %s22, %s34
      %s57 = ssub.s32 %s23, %s30
      %s58 = sor.u32 %s56, %s57
      %p59 = scmp.eq.s32.totalorder %s58, 0
      %s61 = sadd.s32 %s60, 1
      %s62 = scalar_select %p59, %s60, %s61
      %p65 = pneg %p59
      %p66 = scmp.eq.s32.totalorder %s15, 1
      %p67 = por %p65, %p66
      %p68 = scmp.ne.s32.totalorder %s60, %s63
      %p69 = scmp.eq.s32.totalorder %s15, 0
      %p70 = por %p68, %p69
      %p71 = scmp.ne.s32.totalorder %s60, %s63
      %p72 = scmp.eq.s32.totalorder %s20, 1
      %p73 = por %p71, %p72
      %p74 = scmp.ne.s32.totalorder %s63, %s64
      %p75 = scmp.eq.s32.totalorder %s20, 0
      %p76 = por %p74, %p75
      %p77 = scmp.ne.s32.totalorder %s63, %s64
      %p78 = scmp.eq.s32.totalorder %s21, 1
      %p79 = por %p77, %p78
      %p81 = scmp.ne.s32.totalorder %s64, %s80
      %p82 = scmp.eq.s32.totalorder %s21, 0
      %p83 = por %p81, %p82
      %s84 = ssub.s32 %s22, %s34
      %s85 = ssub.s32 %s23, %s30
      %s86 = sor.u32 %s84, %s85
      %p87 = scmp.eq.s32.totalorder %s86, 0
      %s89 = sadd.s32 %s88, 1
      %s90 = scalar_select %p87, %s88, %s89
      %p93 = pneg %p87
      %p94 = scmp.eq.s32.totalorder %s15, 1
      %p95 = por %p93, %p94
      %p96 = scmp.ne.s32.totalorder %s88, %s91
      %p97 = scmp.eq.s32.totalorder %s15, 0
      %p98 = por %p96, %p97
      %p99 = scmp.ne.s32.totalorder %s88, %s91
      %p100 = scmp.eq.s32.totalorder %s20, 1
      %p101 = por %p99, %p100
      %p102 = scmp.ne.s32.totalorder %s91, %s92
      %p103 = scmp.eq.s32.totalorder %s20, 0
      %p104 = por %p102, %p103
      %p105 = scmp.ne.s32.totalorder %s91, %s92
      %p106 = scmp.eq.s32.totalorder %s21, 1
      %p107 = por %p105, %p106
      %p109 = scmp.ne.s32.totalorder %s92, %s108
      %p110 = scmp.eq.s32.totalorder %s21, 0
      %p111 = por %p109, %p110
      %p112 = scmp.le.s32.totalorder 1, %s15
      %p113 = scmp.lt.s32.totalorder %s15, 3
      %p114 = pnand %p112, %p113
      %p115 = pneg %p114
      // Predicated region
      $region9: #{tpu_custom_call.1} parent=5 // pred_check
        _
      $region10: #{tpu_custom_call.1} parent=5 // pred_check_branch
        %117 = sbr.rel (%p114) target = $region12
      $region11: #{tpu_custom_call.1} parent=5 // pred_region
        %s118 = ssub.s32 %s15, 1
        // Predicated region
        $region13: #{tpu_custom_call.1} parent=11 // pred_check
          %p119 = pneg %p48
        $region14: #{tpu_custom_call.1} parent=11 // pred_check_branch
          %121 = sbr.rel (%p119) target = $region16
        $region15: #{tpu_custom_call.1} parent=11 // pred_region
          %s123 = ssub.s32 16, 16
          %124 = vsyncadd [#allocation5], %s123
          %127 = dma.hbm_to_smem %s0, 16, [#allocation2], [#allocation5]
        $region16: #{tpu_custom_call.1} parent=11 // pred_fallthru
          _
      $region12: #{tpu_custom_call.1} parent=5 // pred_fallthru
        _
      %p128 = scmp.lt.s32.totalorder %s15, 2
      // Predicated region
      $region17: #{tpu_custom_call.1} parent=5 // pred_check
        %p129 = pneg %p128
      $region18: #{tpu_custom_call.1} parent=5 // pred_check_branch
        %131 = sbr.rel (%p129) target = $region20
      $region19: #{tpu_custom_call.1} parent=5 // pred_region
        // Predicated region
        $region21: #{tpu_custom_call.1} parent=19 // pred_check
          %p132 = pneg %p70
        $region22: #{tpu_custom_call.1} parent=19 // pred_check_branch
          %134 = sbr.rel (%p132) target = $region24
        $region23: #{tpu_custom_call.1} parent=19 // pred_region
          %s135 = sand.u32 %s60, 1
          %s136 = scalar_lea.sflag [#allocation3], %s135
          %s137 = sand.u32 %s60, 1
          %s138 = smul.addr %s137, 24
          %s139 = scalar_lea.vmem [#allocation6], %s138
          %s141 = ssub.s32 384, 384
          %142 = vsyncadd %s136, %s141
          %s143 = smul.addr %s22, 3
          %s144 = sadd.s32 %s23, %s143
          %s145 = smul.addr %s144, 128
          %s146 = scalar_lea.hbm %s1, %s145
          %s147 = sshll.u32 %s139, 4
          %s148 = int_to_ptr.vmem [resolvable:$true] %s147
          %153 = dma.hbm_to_vmem [thread:$0]  %s146, 384, %s148, %s136, 128, 128, 8
        $region24: #{tpu_custom_call.1} parent=19 // pred_fallthru
          _
      $region20: #{tpu_custom_call.1} parent=5 // pred_fallthru
        _
      %p154 = scmp.le.s32.totalorder 1, %s15
      %p155 = scmp.lt.s32.totalorder %s15, 3
      %p156 = pnand %p154, %p155
      %p157 = pneg %p156
      // Predicated region
      $region25: #{tpu_custom_call.1} parent=5 // pred_check
        _
      $region26: #{tpu_custom_call.1} parent=5 // pred_check_branch
        %159 = sbr.rel (%p156) target = $region28
      $region27: #{tpu_custom_call.1} parent=5 // pred_region
        %s160 = ssub.s32 %s15, 1
        // Predicated region
        $region29: #{tpu_custom_call.1} parent=27 // pred_check
          %p161 = pneg %p48
        $region30: #{tpu_custom_call.1} parent=27 // pred_check_branch
          %163 = sbr.rel (%p161) target = $region32
        $region31: #{tpu_custom_call.1} parent=27 // pred_region
          %164 = dma.done [#allocation5], 16
        $region32: #{tpu_custom_call.1} parent=27 // pred_fallthru
          _
        %s165 = sand.u32 %s63, 1
        %s166 = scalar_lea.sflag [#allocation3], %s165
        %s167 = sand.u32 %s63, 1
        %s168 = smul.addr %s167, 24
        %s169 = scalar_lea.vmem [#allocation6], %s168
        // Predicated region
        $region33: #{tpu_custom_call.1} parent=27 // pred_check
          %p170 = pneg %p76
        $region34: #{tpu_custom_call.1} parent=27 // pred_check_branch
          %172 = sbr.rel (%p170) target = $region36
        $region35: #{tpu_custom_call.1} parent=27 // pred_region
          %173 = dma.done %s166, 384
        $region36: #{tpu_custom_call.1} parent=27 // pred_fallthru
          _
        %174 = sfence
        %p175 = pneg %p48
        %p176 = pneg %p45
        %s177 = sand.u32 %s63, 1
        %s178 = scalar_lea.sflag [#allocation3], %s177
        %s179 = sand.u32 %s63, 1
        %s180 = smul.addr %s179, 24
        %s181 = scalar_lea.vmem [#allocation6], %s180
        %p182 = pneg %p76
        %p183 = pneg %p73
        %p184 = pneg %p104
        %p185 = pneg %p101
        %s186 = sand.u32 %s91, 1
        %s187 = scalar_lea.sflag [#allocation4], %s186
        %s188 = sand.u32 %s91, 1
        %s189 = smul.addr %s188, 24
        %s190 = scalar_lea.vmem [#allocation7], %s189
        %s191 = sld [smem:[#allocation2 + %s24]]
        %v192 = vld [vmem:[%s169] sm:$0xff]
        %s193 = scalar_lea.vmem %s169, 8 [#allocation6]
        %v194 = vld [vmem:[%s193] sm:$0xff]
        %s195 = scalar_lea.vmem %s169, 16 [#allocation6]
        %v196 = vld [vmem:[%s195] sm:$0xff]
        %v197 = vmax.f32 %v192, %v194
        %v198 = vmax.f32 %v197, %v196
        %v199 = vmin.f32 %v192, %v194
        %v200 = vmin.f32 %v199, %v196
        %v201 = vsub.f32 %v198, %v200
        %v202 = vadd.f32 %v198, 1e-06
        %v203 = vrcp.pop %v202
        %v204 = vmul.f32 %v201, %v203
        %vm205 = vcmp.eq.f32.partialorder %v201, 0.0
        %v206 = vsel %vm205, 1.0, %v201
        %v207 = vsub.f32 %v198, %v192
        %v208 = vsub.f32 %v198, %v194
        %v209 = vsub.f32 %v198, %v196
        %vm210 = vcmp.eq.f32.partialorder %v192, %v198
        %v211 = vsub.f32 %v209, %v208
        %vm212 = vcmp.eq.f32.partialorder %v194, %v198
        %v213 = vmul.f32 %v206, 2.0
        %v214 = vadd.f32 %v213, %v207
        %v215 = vsub.f32 %v214, %v209
        %v216 = vmul.f32 %v206, 4.0
        %v217 = vadd.f32 %v216, %v208
        %v218 = vsub.f32 %v217, %v207
        %v219 = vsel %vm212, %v215, %v218
        %v220 = vsel %vm210, %v211, %v219
        %v221 = vmul.f32 %v206, 6.0
        %v222 = vrcp.pop %v221
        %v223 = vmul.f32 %v220, %v222
        %v224 = vfloor.f32 %v223
        %v225 = vsub.f32 %v223, %v224
        %v226 = vstv %s191
        %v227 = vadd.f32 %v225, %v226
        %v228 = vfloor.f32 %v227
        %v229 = vsub.f32 %v227, %v228
        %v230 = vmul.f32 %v229, 6.0
        %v231 = vmul.f32 %v198, %v204
        %v232 = vadd.f32 %v230, 5.0
        %vm233 = vcmp.ge.f32.partialorder %v232, 6.0
        %v234 = vsub.f32 %v232, 6.0
        %v235 = vsel %vm233, %v234, %v232
        %v236 = vsub.f32 4.0, %v235
        %v237 = vmin.f32 %v235, %v236
        %v238 = vmax.f32 %v237, 0.0
        %v239 = vmin.f32 %v238, 1.0
        %v240 = vmul.f32 %v231, %v239
        %v241 = vsub.f32 %v198, %v240
        %242 = vst [vmem:[%s190] sm:$0xff] %v241
        %v243 = vadd.f32 %v230, 3.0
        %vm244 = vcmp.ge.f32.partialorder %v243, 6.0
        %v245 = vsub.f32 %v243, 6.0
        %v246 = vsel %vm244, %v245, %v243
        %v247 = vsub.f32 4.0, %v246
        %v248 = vmin.f32 %v246, %v247
        %v249 = vmax.f32 %v248, 0.0
        %v250 = vmin.f32 %v249, 1.0
        %v251 = vmul.f32 %v231, %v250
        %v252 = vsub.f32 %v198, %v251
        %s253 = scalar_lea.vmem %s190, 8 [#allocation7]
        %254 = vst [vmem:[%s253] sm:$0xff] %v252
        %v255 = vadd.f32 %v230, 1.0
        %vm256 = vcmp.ge.f32.partialorder %v255, 6.0
        %v257 = vsub.f32 %v255, 6.0
        %v258 = vsel %vm256, %v257, %v255
        %v259 = vsub.f32 4.0, %v258
        %v260 = vmin.f32 %v258, %v259
        %v261 = vmax.f32 %v260, 0.0
        %v262 = vmin.f32 %v261, 1.0
        %v263 = vmul.f32 %v231, %v262
        %v264 = vsub.f32 %v198, %v263
        %s265 = scalar_lea.vmem %s190, 16 [#allocation7]
        %266 = vst [vmem:[%s265] sm:$0xff] %v264
        %s267 = sand.u32 %s91, 1
        %s268 = scalar_lea.sflag [#allocation4], %s267
        %s269 = sand.u32 %s91, 1
        %s270 = smul.addr %s269, 24
        %s271 = scalar_lea.vmem [#allocation7], %s270
        // Predicated region
        $region37: #{tpu_custom_call.1} parent=27 // pred_check
          %p272 = pneg %p101
        $region38: #{tpu_custom_call.1} parent=27 // pred_check_branch
          %274 = sbr.rel (%p272) target = $region40
        $region39: #{tpu_custom_call.1} parent=27 // pred_region
          %s276 = ssub.s32 384, 384
          %277 = vsyncadd %s268, %s276
          %s278 = smul.addr %s24, 3
          %s279 = sadd.s32 %s25, %s278
          %s280 = smul.addr %s279, 128
          %s281 = scalar_lea.hbm %s2, %s280
          %s282 = sshll.u32 %s271, 4
          %s283 = int_to_ptr.vmem [resolvable:$true] %s282
          %288 = dma.vmem_to_hbm [thread:$0]  %s283, 384, %s281, %s268, 128, 128, 8
        $region40: #{tpu_custom_call.1} parent=27 // pred_fallthru
          _
      $region28: #{tpu_custom_call.1} parent=5 // pred_fallthru
        _
      %p289 = scmp.le.s32.totalorder 2, %s15
      // Predicated region
      $region41: #{tpu_custom_call.1} parent=5 // pred_check
        %p290 = pneg %p289
      $region42: #{tpu_custom_call.1} parent=5 // pred_check_branch
        %292 = sbr.rel (%p290) target = $region44
      $region43: #{tpu_custom_call.1} parent=5 // pred_region
        %s293 = ssub.s32 %s15, 2
        // Predicated region
        $region45: #{tpu_custom_call.1} parent=43 // pred_check
          %p294 = pneg %p107
        $region46: #{tpu_custom_call.1} parent=43 // pred_check_branch
          %296 = sbr.rel (%p294) target = $region48
        $region47: #{tpu_custom_call.1} parent=43 // pred_region
          %s297 = sand.u32 %s92, 1
          %s298 = scalar_lea.sflag [#allocation4], %s297
          %s299 = sand.u32 %s92, 1
          %s300 = smul.addr %s299, 24
          %s301 = scalar_lea.vmem [#allocation7], %s300
          %302 = dma.done %s298, 384
        $region48: #{tpu_custom_call.1} parent=43 // pred_fallthru
          _
      $region44: #{tpu_custom_call.1} parent=5 // pred_fallthru
        _
    $region6: #{tpu_custom_call.1} parent=1 // loop_footer
      %s19 = sadd.s32 1, %s15
    $region7: #{tpu_custom_call.1} parent=1 // loop_footer_branch
      %14 = sbr.rel target = $region3
    $region8: #{tpu_custom_call.1} parent=1 // loop_exit
      _
    %303 = vsyncpa [#allocation3], 1
    %s304 = scalar_lea.sflag [#allocation3], 1
    %305 = vsyncpa %s304, 1
    %306 = vsyncpa [#allocation4], 1
    %s307 = scalar_lea.sflag [#allocation4], 1
    %308 = vsyncpa %s307, 1
    %309 = vsyncpa [#allocation5], 1
    %s310 = scalar_lea.sflag [#allocation5], 1
    %311 = vsyncpa %s310, 1

</llo_original>
